<compile_context>
chip_gen: v5e
topology: v5e:2x2
jax: 0.10.0
libtpu: 0.0.40
codegen_flags: <defaults>
</compile_context>

<pallas_src>
import jax
import jax.numpy as jnp
from jax.experimental import pallas as pl
from jax.experimental.pallas import tpu as pltpu

INTERNAL_DIM = 4  # stands in for self.internal_dim on the PyTorch module


# ---------------------------------------------------------------------------
# Primary path: zero-copy aliased pass-through (the reshape is metadata-only).
# ---------------------------------------------------------------------------
def _alias_passthrough_kernel(x_ref, o_ref):
    del x_ref
    # Fake read/write dep on the aliased output: no data movement, keeps the
    # otherwise-empty body and pins the output's materialization.
    pltpu.touch(o_ref)


def _passthrough(x):
    return pl.pallas_call(
        _alias_passthrough_kernel,
        out_shape=jax.ShapeDtypeStruct(x.shape, x.dtype),
        in_specs=[pl.BlockSpec(memory_space=pl.ANY)],
        out_specs=pl.BlockSpec(memory_space=pl.ANY),
        input_output_aliases={0: 0},
        compiler_params=pltpu.CompilerParams(has_side_effects=True),
    )(x)


# ---------------------------------------------------------------------------
# Fallback path: lane-dense streaming copy (only used if the alias/ANY path is
# unavailable on this jax build, or if a materialized copy is explicitly wanted).
# ---------------------------------------------------------------------------
def _copy_kernel(x_ref, o_ref):
    o_ref[...] = x_ref[...]


_SUBLANE_PACK = {4: 8, 2: 16, 1: 32}  # f32 / bf16 / int8+fp8 sublane packing


def _tiled_copy(x, *, target_block_bytes=4 << 20):
    total = x.size
    itemsize = jnp.dtype(x.dtype).itemsize
    sublane = _SUBLANE_PACK.get(itemsize, 8)

    # Present the contiguous buffer as a lane-dense (rows, lanes) slab so every
    # load/store is an unmasked full-rate vld/vst regardless of the module's D.
    if total % 128 == 0:
        lanes = 128
        while lanes * 2 <= 2048 and total % (lanes * 2) == 0:
            lanes *= 2
    else:
        # TODO(synk): huge buffers whose size is not a multiple of 128 would need
        # a padded copy; a single full-extent block is fine for realistic sizes.
        lanes = total
    rows = total // lanes
    x2d = x.reshape(rows, lanes)  # free metadata reshape

    block_rows = max(1, target_block_bytes // (lanes * itemsize))
    if block_rows >= rows:
        block_rows = rows  # full extent is always a legal block shape
        # Give v7x's two TensorCores equal clean halves when that is free.
        if total * itemsize >= (1 << 19) and rows % (2 * sublane) == 0:
            block_rows = rows // 2
    else:
        block_rows = max(sublane, (block_rows // sublane) * sublane)
        # Prefer a tile that divides rows evenly (avoid a ragged masked block).
        cand = block_rows
        while cand >= sublane and rows % cand != 0:
            cand -= sublane
        if cand >= max(sublane, block_rows // 2):
            block_rows = cand

    grid = (pl.cdiv(rows, block_rows),)
    return pl.pallas_call(
        _copy_kernel,
        out_shape=jax.ShapeDtypeStruct((rows, lanes), x.dtype),
        grid_spec=pltpu.PrefetchScalarGridSpec(
            num_scalar_prefetch=0,
            grid=grid,
            in_specs=[pl.BlockSpec((block_rows, lanes), lambda r: (r, 0))],
            out_specs=pl.BlockSpec((block_rows, lanes), lambda r: (r, 0)),
        ),
        compiler_params=pltpu.CompilerParams(
            dimension_semantics=("parallel",),
            vmem_limit_bytes=32 << 20,  # 4 live buffers x <=4 MiB blocks + headroom
        ),
    )(x2d)


# ---------------------------------------------------------------------------
# ReshapeModule.forward
# ---------------------------------------------------------------------------
def reshape_module(x, internal_dim=INTERNAL_DIM):
    """x: (..., D) with D % internal_dim == 0 -> (..., internal_dim, D // internal_dim)."""
    *lead, d = x.shape
    assert d % internal_dim == 0, (d, internal_dim)
    out_shape = (*lead, internal_dim, d // internal_dim)

    try:
        y = _passthrough(x)
    except Exception:  # defensive: fall back to the tuned streaming copy
        y = _tiled_copy(x)

    # Free metadata reshape: split the last dim into (internal_dim, rest).
    return y.reshape(out_shape)


if __name__ == "__main__":
    key = jax.random.PRNGKey(0)
    # Small shapes consistent with the module: batch=2, seq=8, hidden=512.
    B, S, D = 2, 8, 512
    x = jax.random.normal(key, (B, S, D), dtype=jnp.float32)

    # Reference (exact row-major PyTorch reshape semantics), computed first.
    ref = x.reshape(B, S, INTERNAL_DIM, D // INTERNAL_DIM)

    out = reshape_module(x, INTERNAL_DIM)
    out = jax.block_until_ready(out)

    assert out.shape == ref.shape, (out.shape, ref.shape)
    assert out.dtype == ref.dtype
    assert bool(jnp.array_equal(out, ref))

    # Also exercise the tiled-copy fallback path explicitly (bf16 input).
    x2 = jax.random.normal(jax.random.PRNGKey(1), (3, 24, 256), dtype=jnp.bfloat16)
    out2 = jax.block_until_ready(
        _tiled_copy(x2).reshape(3, 24, INTERNAL_DIM, 256 // INTERNAL_DIM)
    )
    ref2 = x2.reshape(3, 24, INTERNAL_DIM, 256 // INTERNAL_DIM)
    assert bool(jnp.array_equal(out2, ref2))

    print("KERNEL_OK")
</pallas_src>

<mosaic_0001>
module attributes {stable_mosaic.version = 11 : i64} {
  func.func @_alias_passthrough_kernel(%arg0: memref<2x8x512xf32, #tpu.memory_space<any>>, %arg1: memref<2x8x512xf32, #tpu.memory_space<any>>) attributes {dimension_semantics = [], scalar_prefetch = 0 : i64, scratch_operands = 0 : i64, tpu.core_type = #tpu.core_type<tc>} {
    return
  }
}

module attributes {stable_mosaic.version = 11 : i64} {
  func.func @_copy_kernel(%arg0: i32, %arg1: memref<4x2048xf32, #tpu.memory_space<vmem>>, %arg2: memref<4x2048xf32, #tpu.memory_space<vmem>>) attributes {dimension_semantics = [#tpu.dimension_semantics<parallel>], iteration_bounds = array<i64: 1>, scalar_prefetch = 0 : i64, scratch_operands = 0 : i64, tpu.core_type = #tpu.core_type<tc>, window_params = [{transform_indices = @transform_0, window_bounds = array<i64: 4, 2048>}, {transform_indices = @transform_1, window_bounds = array<i64: 4, 2048>}]} {
    %c0 = arith.constant 0 : index
    %c0_0 = arith.constant 0 : index
    %0 = vector.load %arg1[%c0, %c0_0] : memref<4x2048xf32, #tpu.memory_space<vmem>>, vector<4x2048xf32>
    %c0_1 = arith.constant 0 : index
    %c0_2 = arith.constant 0 : index
    %1 = vector.load %arg2[%c0_1, %c0_2] : memref<4x2048xf32, #tpu.memory_space<vmem>>, vector<4x2048xf32>
    tpu.vector_store %arg2[%c0_1, %c0_2], %0 {strides = array<i32>} : memref<4x2048xf32, #tpu.memory_space<vmem>>, vector<4x2048xf32>,
    return
  }
  func.func @transform_0(%arg0: i32) -> (i32, i32) {
    %c0_i32 = arith.constant 0 : i32
    %c0_i32_0 = arith.constant 0 : i32
    return %arg0, %c0_i32 : i32, i32
  }
  func.func @transform_1(%arg0: i32) -> (i32, i32) {
    %c0_i32 = arith.constant 0 : i32
    %c0_i32_0 = arith.constant 0 : i32
    return %arg0, %c0_i32 : i32, i32
  }
}

</mosaic_0001>

<llo_original>
// kernel: tpu_custom_call.1
$region0: #{tpu_custom_call.1}
  #allocation0 [shape = 'u32[]', space=smem, size = 0x4, offset = 0x4, fixed_abs, tag = 'smem constant byte address 0x4 - core index']
  #allocation1 [shape = 'u32[72,128]{1,0:T(1,128)}', space=vmem, size = 0x9000, scoped, tag = 'internal scratch']
  %s0 = inlined_call_operand.hbm [shape: f32[2,8,512], index: 0, kind: input, shape index: {}, may-alias: {0,1}]
  %s1 = inlined_call_operand.hbm [shape: f32[2,8,512], index: 1, kind: output, shape index: {}, may-alias: {0,1}]
  %s2 = sld [smem:[#allocation0]]
  $region2: #{tpu_custom_call.1} parent=0
    _
  %s4 = ssub.s32 1, %s2
  %s5 = scalar_select 0, %s4, %s2

// kernel: tpu_custom_call.1
$region0: #{tpu_custom_call.1}
  #allocation0 [shape = 'u32[]', space=smem, size = 0x4, offset = 0x4, fixed_abs, tag = 'smem constant byte address 0x4 - core index']
  #allocation1 [shape = 'u32[72,128]{1,0:T(1,128)}', space=vmem, size = 0x9000, scoped, tag = 'internal scratch']
  %s0 = inlined_call_operand.hbm [shape: f32[4,2048], index: 0, kind: input, shape index: {}]
  %s1 = inlined_call_operand.hbm [shape: f32[4,2048], index: 1, kind: output, shape index: {}]
  %s2 = sld [smem:[#allocation0]]
  $region18: #{tpu_custom_call.1} parent=0
    _
  %s4 = ssub.s32 1, %s2
  %s5 = scalar_select 0, %s4, %s2
  $region1: #{tpu_custom_call.1} parent=0
    #allocation2 [shape = 'u8[32768]{0}', space=vmem, size = 0x8000, scoped, tag = 'input window, operand 0, single buffered']
    #allocation3 [shape = 's32[1]{0}', space=sflag, size = 0x4, scoped, tag = 'scoped memory for tpu_custom_call.1']
    #allocation4 [shape = 's32[1]{0}', space=sflag, size = 0x4, scoped, tag = 'scoped memory for tpu_custom_call.1']
    #allocation5 [shape = 'u8[32768]{0}', space=vmem, size = 0x8000, scoped, tag = 'output window, operand 0, single buffered']
    %6 = vsyncpa [#allocation3], 0
    %7 = vsyncpa [#allocation4], 0
    // Predicated region
    $region2: #{tpu_custom_call.1} parent=1 // pred_check
      _
    $region3: #{tpu_custom_call.1} parent=1 // pred_check_branch
      %9 = sbr.rel (0) target = $region5
    $region4: #{tpu_custom_call.1} parent=1 // pred_region
      %11 = vsyncadd [#allocation3], 0
      %s13 = sshll.u32 %s0, 4
      %s14 = int_to_ptr.hbm [resolvable:$true] %s13
      %s15 = sshll.u32 [#allocation2], 4
      %s16 = int_to_ptr.vmem [resolvable:$true] %s15
      %18 = dma.hbm_to_vmem [thread:$0]  %s14, 1024, %s16, [#allocation3]
    $region5: #{tpu_custom_call.1} parent=1 // pred_fallthru
      _
    // Predicated region
    $region6: #{tpu_custom_call.1} parent=1 // pred_check
      _
    $region7: #{tpu_custom_call.1} parent=1 // pred_check_branch
      %20 = sbr.rel (0) target = $region9
    $region8: #{tpu_custom_call.1} parent=1 // pred_region
      %22 = dma.done [#allocation3], 1024
    $region9: #{tpu_custom_call.1} parent=1 // pred_fallthru
      _
    %v23 = vld [vmem:[#allocation2] sm:$0xff]
    %v24 = vld [vmem:[#allocation2 + $0x8] sm:$0xff]
    %v25 = vld [vmem:[#allocation2 + $0x10] sm:$0xff]
    %v26 = vld [vmem:[#allocation2 + $0x18] sm:$0xff]
    %v27 = vld [vmem:[#allocation2 + $0x20] sm:$0xff]
    %v28 = vld [vmem:[#allocation2 + $0x28] sm:$0xff]
    %v29 = vld [vmem:[#allocation2 + $0x30] sm:$0xff]
    %v30 = vld [vmem:[#allocation2 + $0x38] sm:$0xff]
    %31 = vst [vmem:[#allocation5] sm:$0xff] %v23
    %32 = vst [vmem:[#allocation5 + $0x8] sm:$0xff] %v24
    %33 = vst [vmem:[#allocation5 + $0x10] sm:$0xff] %v25
    %34 = vst [vmem:[#allocation5 + $0x18] sm:$0xff] %v26
    %35 = vst [vmem:[#allocation5 + $0x20] sm:$0xff] %v27
    %36 = vst [vmem:[#allocation5 + $0x28] sm:$0xff] %v28
    %37 = vst [vmem:[#allocation5 + $0x30] sm:$0xff] %v29
    %38 = vst [vmem:[#allocation5 + $0x38] sm:$0xff] %v30
    // Predicated region
    $region10: #{tpu_custom_call.1} parent=1 // pred_check
      _
    $region11: #{tpu_custom_call.1} parent=1 // pred_check_branch
      %40 = sbr.rel (0) target = $region13
    $region12: #{tpu_custom_call.1} parent=1 // pred_region
      %42 = vsyncadd [#allocation4], 0
      %s44 = sshll.u32 [#allocation5], 4
      %s45 = int_to_ptr.vmem [resolvable:$true] %s44
      %s46 = sshll.u32 %s1, 4
      %s47 = int_to_ptr.hbm [resolvable:$true] %s46
      %49 = dma.vmem_to_hbm [thread:$0]  %s45, 1024, %s47, [#allocation4]
    $region13: #{tpu_custom_call.1} parent=1 // pred_fallthru
      _
    // Predicated region
    $region14: #{tpu_custom_call.1} parent=1 // pred_check
      _
    $region15: #{tpu_custom_call.1} parent=1 // pred_check_branch
      %51 = sbr.rel (0) target = $region17
    $region16: #{tpu_custom_call.1} parent=1 // pred_region
      %53 = dma.done [#allocation4], 1024
    $region17: #{tpu_custom_call.1} parent=1 // pred_fallthru
      _
    %54 = vsyncpa [#allocation3], 1
    %55 = vsyncpa [#allocation4], 1

</llo_original>
